<compile_context>
chip_gen: v7x
topology: tpu7x:2x2x1
jax: 0.10.0
libtpu: 0.0.40
codegen_flags: <defaults>
</compile_context>

<pallas_src>
import jax
import jax.numpy as jnp
from jax.experimental import pallas as pl
from jax.experimental.pallas import tpu as pltpu


def _round_up(x, m):
    return ((x + m - 1) // m) * m


# --------------------------------------------------------------------------- #
# Kernel
# --------------------------------------------------------------------------- #
def mlp_decoder_kernel(x_ref, base_ref,
                       w1_ref, b1_ref,
                       w2_ref, b2_ref,
                       w3_ref, b3_ref,
                       out_ref, h_ref):
    # Hidden layers depend only on the batch tile -> compute once per batch tile
    # (first output-column step, axis 1 is sequential/"arbitrary") and reuse the
    # bf16 VMEM scratch for every j.
    @pl.when(pl.program_id(1) == 0)
    def _():
        h = jnp.dot(x_ref[...], w1_ref[...], preferred_element_type=jnp.float32)
        h = jnp.maximum(h + b1_ref[...], 0.0)
        h = jnp.dot(h.astype(jnp.bfloat16), w2_ref[...],
                    preferred_element_type=jnp.float32)
        h = jnp.maximum(h + b2_ref[...], 0.0)
        h_ref[...] = h.astype(jnp.bfloat16)

    # Final layer on this output-column tile: delta = h @ w3[:, j] + b3[j].
    # Boundary blocks (partial B / d_out) contain stale rows/cols; they only
    # produce garbage in their own rows/cols and Pallas masks the writeback.
    delta = jnp.dot(h_ref[...], w3_ref[...],
                    preferred_element_type=jnp.float32) + b3_ref[...]
    out_ref[...] = (base_ref[...] + delta).astype(out_ref.dtype)


# --------------------------------------------------------------------------- #
# Parameter preparation (one-time; hoisted out of the forward)
# --------------------------------------------------------------------------- #
def prepare_params(params):
    """Zero-pad all feature dims to multiples of 128 and cast weights to bf16.

    Zero padding matters for correctness: padded w1/w2 columns produce exactly-0
    hidden activations, which must meet zero (not garbage) rows in w2/w3.
    """
    d_in, h1 = params["w1"].shape
    h2 = params["w2"].shape[1]
    d_out = params["w3"].shape[1]
    d_in_p, h1_p, h2_p, d_out_p = (_round_up(d, 128) for d in (d_in, h1, h2, d_out))
    return {
        "w1": jnp.pad(params["w1"], ((0, d_in_p - d_in), (0, h1_p - h1))).astype(jnp.bfloat16),
        "b1": jnp.pad(params["b1"], ((0, 0), (0, h1_p - h1))).astype(jnp.float32),
        "w2": jnp.pad(params["w2"], ((0, h1_p - h1), (0, h2_p - h2))).astype(jnp.bfloat16),
        "b2": jnp.pad(params["b2"], ((0, 0), (0, h2_p - h2))).astype(jnp.float32),
        "w3": jnp.pad(params["w3"], ((0, h2_p - h2), (0, d_out_p - d_out))).astype(jnp.bfloat16),
        "b3": jnp.pad(params["b3"], ((0, 0), (0, d_out_p - d_out))).astype(jnp.float32),
        "dims": (d_in, h1, h2, d_out),
    }


def _tpu_vmem_and_cores():
    """Per-generation VMEM capacity and TensorCore count (conservative fallback)."""
    vmem_cap = 64 * 1024 * 1024
    n_tc = 1
    try:
        info = pltpu.get_tpu_info()
        vmem_cap = int(getattr(info, "vmem_capacity_bytes", vmem_cap))
        # v7x: 64 MiB VMEM per TC, 2 TCs/chip.  v5e/v6e: 128 MiB, 1 TC.
        n_tc = 2 if vmem_cap <= 64 * 1024 * 1024 else 1
    except Exception:  # pragma: no cover - conservative fallback
        pass
    return vmem_cap, n_tc


# --------------------------------------------------------------------------- #
# Wrapper
# --------------------------------------------------------------------------- #
def mlp_decoder(encoded_input, baseline_expression, params, *,
                tile_b=None, tile_n=None, vmem_budget_frac=0.7, out_dtype=None):
    """Fused MLP decoder forward.

    encoded_input:        [B, input_dim]  float32
    baseline_expression:  [B, output_dim] float32 (NOT padded, NOT copied)
    params: raw dict (w1,b1,w2,b2,w3,b3, stored transposed vs nn.Linear.weight)
            or the output of prepare_params() (preferred: pad/cast once).
    """
    if "dims" not in params:
        params = prepare_params(params)
    d_in, h1, h2, d_out = params["dims"]
    B = encoded_input.shape[0]
    assert encoded_input.shape == (B, d_in)
    assert baseline_expression.shape == (B, d_out)
    d_in_p, h1_p = params["w1"].shape
    h2_p, d_out_p = params["w3"].shape
    if out_dtype is None:
        out_dtype = baseline_expression.dtype

    vmem_cap, n_tc = _tpu_vmem_and_cores()
    budget = int(vmem_cap * vmem_budget_frac)

    # Generation-aware tile defaults (128 MiB chips -> big tiles; v7x -> smaller
    # ceiling).  footprint() below re-verifies against the actual budget.
    if tile_b is None:
        tile_b = 512 if vmem_cap > 64 * 1024 * 1024 else 256
    if tile_n is None:
        tile_n = 2048 if vmem_cap > 64 * 1024 * 1024 else 1024

    B_al = _round_up(B, 8)
    tb = max(8, min(_round_up(tile_b, 8), B_al))
    tn = max(128, min(_round_up(tile_n, 128), d_out_p))

    # 2-TC chips (v7x): make sure both TensorCores get a batch tile
    # (axis 0 is "parallel"; axis 1 must stay sequential for the h_ref scratch).
    if n_tc >= 2 and B_al > 8 and pl.cdiv(B_al, tb) < n_tc:
        tb = max(8, _round_up(pl.cdiv(B_al, n_tc), 8))

    base_bytes = jnp.dtype(baseline_expression.dtype).itemsize
    out_bytes = jnp.dtype(out_dtype).itemsize

    def footprint(tb_, tn_):
        # Resident hidden-layer weights/biases: single-buffered (Buffered(1)).
        resident = 2 * (d_in_p * h1_p + h1_p * h2_p) + 4 * 8 * (h1_p + h2_p)
        # Streamed, double-buffered tiles.
        streamed = 2 * (2 * h2_p * tn_            # w3 tile (bf16)
                        + 4 * 8 * tn_             # b3 tile (f32, sublane-padded)
                        + base_bytes * tb_ * tn_  # baseline tile
                        + out_bytes * tb_ * tn_   # output tile
                        + 2 * tb_ * d_in_p)       # x tile (bf16)
        scratch = 2 * tb_ * h2_p                  # bf16 hidden scratch
        return resident + streamed + scratch

    # Shrink tn first (it dominates the footprint), then tb; keep tb >= 256
    # (MXU M-dimension utilization) unless absolutely forced.
    min_tb_soft = min(tb, 256)
    while footprint(tb, tn) > budget and tn > 128:
        tn = max(128, _round_up(tn // 2, 128))
    while footprint(tb, tn) > budget and tb > min_tb_soft:
        tb = max(min_tb_soft, _round_up(tb // 2, 8))
    while footprint(tb, tn) > budget and tb > 8:
        tb = max(8, _round_up(tb // 2, 8))

    # Per-call prep: only the tiny encoded input is padded (zero K columns) and
    # cast to bf16; baseline and the output are used at their natural shapes.
    x = encoded_input
    if d_in_p != d_in:
        x = jnp.pad(x, ((0, 0), (0, d_in_p - d_in)))
    x = x.astype(jnp.bfloat16)

    grid = (pl.cdiv(B, tb), pl.cdiv(d_out, tn))

    def build(resident_mode):
        in_specs = [
            # batch-tiled activations (independent of j)
            pl.BlockSpec((tb, d_in_p), lambda i, j: (i, 0)),
            # baseline tile (i, j) — boundary blocks masked by Pallas
            pl.BlockSpec((tb, tn), lambda i, j: (i, j)),
            # hidden-layer weights/biases: fully resident, grid-invariant
            pl.BlockSpec((d_in_p, h1_p), lambda i, j: (0, 0), pipeline_mode=resident_mode),
            pl.BlockSpec((1, h1_p), lambda i, j: (0, 0), pipeline_mode=resident_mode),
            pl.BlockSpec((h1_p, h2_p), lambda i, j: (0, 0), pipeline_mode=resident_mode),
            pl.BlockSpec((1, h2_p), lambda i, j: (0, 0), pipeline_mode=resident_mode),
            # final-layer weights/bias streamed per output-column tile
            pl.BlockSpec((h2_p, tn), lambda i, j: (0, j)),
            pl.BlockSpec((1, tn), lambda i, j: (0, j)),
        ]
        return pl.pallas_call(
            mlp_decoder_kernel,
            out_shape=jax.ShapeDtypeStruct((B, d_out), out_dtype),
            grid=grid,
            in_specs=in_specs,
            out_specs=pl.BlockSpec((tb, tn), lambda i, j: (i, j)),
            scratch_shapes=[pltpu.VMEM((tb, h2_p), jnp.bfloat16)],
            compiler_params=pltpu.CompilerParams(
                dimension_semantics=("parallel", "arbitrary"),
                vmem_limit_bytes=budget,
            ),
        )

    args = (x, baseline_expression,
            params["w1"], params["b1"], params["w2"], params["b2"],
            params["w3"], params["b3"])
    try:
        # Single-buffer the grid-invariant operands (pure VMEM recovery).
        out = build(pl.Buffered(1))(*args)
    except Exception:  # pragma: no cover - fallback if Buffered(1) unsupported
        out = build(None)(*args)
    return out


# --------------------------------------------------------------------------- #
# Init + reference
# --------------------------------------------------------------------------- #
def init_params(key, input_dim, output_dim, hidden_dims=(256, 128)):
    """Deterministic init; shapes match nn.Linear (stored transposed: (in, out))."""
    dims = [input_dim, *hidden_dims, output_dim]
    params = {}
    keys = jax.random.split(key, len(dims) - 1)
    for idx, (d_i, d_o) in enumerate(zip(dims[:-1], dims[1:]), start=1):
        kw, kb = jax.random.split(keys[idx - 1])
        bound = 1.0 / jnp.sqrt(d_i)  # matches PyTorch Linear default init range
        params[f"w{idx}"] = jax.random.uniform(
            kw, (d_i, d_o), jnp.float32, minval=-bound, maxval=bound)
        params[f"b{idx}"] = jax.random.uniform(
            kb, (1, d_o), jnp.float32, minval=-bound, maxval=bound)
    return params


def mlp_decoder_ref(encoded_input, baseline_expression, params):
    """Reference mirroring the kernel numerics (bf16 operands, f32 accumulation)."""
    x = encoded_input.astype(jnp.bfloat16)
    w1 = params["w1"].astype(jnp.bfloat16)
    w2 = params["w2"].astype(jnp.bfloat16)
    w3 = params["w3"].astype(jnp.bfloat16)
    h = jnp.dot(x, w1, preferred_element_type=jnp.float32) + params["b1"]
    h = jnp.maximum(h, 0.0)
    h = jnp.dot(h.astype(jnp.bfloat16), w2,
                preferred_element_type=jnp.float32) + params["b2"]
    h = jnp.maximum(h, 0.0)
    delta = jnp.dot(h.astype(jnp.bfloat16), w3,
                    preferred_element_type=jnp.float32) + params["b3"]
    return baseline_expression + delta


if __name__ == "__main__":
    B, INPUT_DIM, OUTPUT_DIM = 8, 32, 64
    HIDDEN_DIMS = (256, 128)

    key = jax.random.PRNGKey(0)
    k_x, k_base, k_params = jax.random.split(key, 3)

    encoded_input = jax.random.normal(k_x, (B, INPUT_DIM), jnp.float32)
    baseline_expression = jax.random.normal(k_base, (B, OUTPUT_DIM), jnp.float32)
    params = init_params(k_params, INPUT_DIM, OUTPUT_DIM, HIDDEN_DIMS)

    # One-time weight pad/cast, hoisted out of the forward pass.
    prepared = prepare_params(params)

    out = mlp_decoder(encoded_input, baseline_expression, prepared)
    out = jax.block_until_ready(out)

    ref = mlp_decoder_ref(encoded_input, baseline_expression, params)
    assert out.shape == (B, OUTPUT_DIM)
    assert jnp.allclose(out, ref, atol=2e-2, rtol=2e-2), "mismatch vs reference"

    print("KERNEL_OK")
</pallas_src>

<mosaic_0001>
module attributes {stable_mosaic.version = 11 : i64} {
  func.func @mlp_decoder_kernel(%arg0: i32, %arg1: i32, %arg2: memref<8x128xbf16, #tpu.memory_space<vmem>>, %arg3: memref<8x128xf32, #tpu.memory_space<vmem>>, %arg4: memref<128x256xbf16, #tpu.memory_space<vmem>>, %arg5: memref<1x256xf32, #tpu.memory_space<vmem>>, %arg6: memref<256x128xbf16, #tpu.memory_space<vmem>>, %arg7: memref<1x128xf32, #tpu.memory_space<vmem>>, %arg8: memref<128x128xbf16, #tpu.memory_space<vmem>>, %arg9: memref<1x128xf32, #tpu.memory_space<vmem>>, %arg10: memref<8x128xf32, #tpu.memory_space<vmem>>, %arg11: memref<8x128xbf16, #tpu.memory_space<vmem>>) attributes {dimension_semantics = [#tpu.dimension_semantics<parallel>, #tpu.dimension_semantics<arbitrary>], iteration_bounds = array<i64: 1, 1>, scalar_prefetch = 0 : i64, scratch_operands = 1 : i64, tpu.core_type = #tpu.core_type<tc>, window_params = [{transform_indices = @transform_0, window_bounds = array<i64: 8, 128>}, {transform_indices = @transform_1, window_bounds = array<i64: 8, 128>}, {pipeline_mode = #tpu.pipeline_mode<synchronous>, transform_indices = @transform_2, window_bounds = array<i64: 128, 256>}, {pipeline_mode = #tpu.pipeline_mode<synchronous>, transform_indices = @transform_3, window_bounds = array<i64: 1, 256>}, {pipeline_mode = #tpu.pipeline_mode<synchronous>, transform_indices = @transform_4, window_bounds = array<i64: 256, 128>}, {pipeline_mode = #tpu.pipeline_mode<synchronous>, transform_indices = @transform_5, window_bounds = array<i64: 1, 128>}, {transform_indices = @transform_6, window_bounds = array<i64: 128, 128>}, {transform_indices = @transform_7, window_bounds = array<i64: 1, 128>}, {transform_indices = @transform_8, window_bounds = array<i64: 8, 128>}]} {
    %c0_i32 = arith.constant 0 : i32
    %0 = arith.cmpi eq, %arg1, %c0_i32 : i32
    %1 = arith.extui %0 : i1 to i32
    %c0_i32_0 = arith.constant 0 : i32
    %2 = arith.cmpi ne, %1, %c0_i32_0 : i32
    scf.if %2 {
      %c0_10 = arith.constant 0 : index
      %c0_11 = arith.constant 0 : index
      %12 = vector.load %arg2[%c0_10, %c0_11] : memref<8x128xbf16, #tpu.memory_space<vmem>>, vector<8x128xbf16>
      %c0_12 = arith.constant 0 : index
      %c0_13 = arith.constant 0 : index
      %13 = vector.load %arg4[%c0_12, %c0_13] : memref<128x256xbf16, #tpu.memory_space<vmem>>, vector<128x256xbf16>
      %cst_14 = arith.constant dense<0.000000e+00> : vector<8x256xf32>
      %14 = tpu.matmul %12, %13, %cst_14 {dimension_numbers = #tpu.dot_dimension_numbers<[1], [0], [0], [1], [0, 0, 1, 1], [], []>} : vector<8x128xbf16>, vector<128x256xbf16>, vector<8x256xf32> -> vector<8x256xf32>
      %c0_15 = arith.constant 0 : index
      %c0_16 = arith.constant 0 : index
      %15 = vector.load %arg5[%c0_15, %c0_16] : memref<1x256xf32, #tpu.memory_space<vmem>>, vector<1x256xf32>
      %16 = vector.broadcast %15 : vector<1x256xf32> to vector<8x256xf32>
      %17 = arith.addf %14, %16 : vector<8x256xf32>
      %cst_17 = arith.constant 0.000000e+00 : f32
      %18 = vector.broadcast %cst_17 : f32 to vector<8x256xf32>
      %19 = arith.maximumf %17, %18 : vector<8x256xf32>
      %20 = arith.truncf %19 : vector<8x256xf32> to vector<8x256xbf16>
      %c0_18 = arith.constant 0 : index
      %c0_19 = arith.constant 0 : index
      %21 = vector.load %arg6[%c0_18, %c0_19] : memref<256x128xbf16, #tpu.memory_space<vmem>>, vector<256x128xbf16>
      %cst_20 = arith.constant dense<0.000000e+00> : vector<8x128xf32>
      %22 = tpu.matmul %20, %21, %cst_20 {dimension_numbers = #tpu.dot_dimension_numbers<[1], [0], [0], [1], [0, 0, 1, 1], [], []>} : vector<8x256xbf16>, vector<256x128xbf16>, vector<8x128xf32> -> vector<8x128xf32>
      %c0_21 = arith.constant 0 : index
      %c0_22 = arith.constant 0 : index
      %23 = vector.load %arg7[%c0_21, %c0_22] : memref<1x128xf32, #tpu.memory_space<vmem>>, vector<1x128xf32>
      %24 = vector.broadcast %23 : vector<1x128xf32> to vector<8x128xf32>
      %25 = arith.addf %22, %24 : vector<8x128xf32>
      %cst_23 = arith.constant 0.000000e+00 : f32
      %26 = vector.broadcast %cst_23 : f32 to vector<8x128xf32>
      %27 = arith.maximumf %25, %26 : vector<8x128xf32>
      %28 = arith.truncf %27 : vector<8x128xf32> to vector<8x128xbf16>
      %c0_24 = arith.constant 0 : index
      %c0_25 = arith.constant 0 : index
      %29 = vector.load %arg11[%c0_24, %c0_25] : memref<8x128xbf16, #tpu.memory_space<vmem>>, vector<8x128xbf16>
      tpu.vector_store %arg11[%c0_24, %c0_25], %28 {strides = array<i32>} : memref<8x128xbf16, #tpu.memory_space<vmem>>, vector<8x128xbf16>,
    } else {
    }
    %c0 = arith.constant 0 : index
    %c0_1 = arith.constant 0 : index
    %3 = vector.load %arg11[%c0, %c0_1] : memref<8x128xbf16, #tpu.memory_space<vmem>>, vector<8x128xbf16>
    %c0_2 = arith.constant 0 : index
    %c0_3 = arith.constant 0 : index
    %4 = vector.load %arg8[%c0_2, %c0_3] : memref<128x128xbf16, #tpu.memory_space<vmem>>, vector<128x128xbf16>
    %cst = arith.constant dense<0.000000e+00> : vector<8x128xf32>
    %5 = tpu.matmul %3, %4, %cst {dimension_numbers = #tpu.dot_dimension_numbers<[1], [0], [0], [1], [0, 0, 1, 1], [], []>} : vector<8x128xbf16>, vector<128x128xbf16>, vector<8x128xf32> -> vector<8x128xf32>
    %c0_4 = arith.constant 0 : index
    %c0_5 = arith.constant 0 : index
    %6 = vector.load %arg9[%c0_4, %c0_5] : memref<1x128xf32, #tpu.memory_space<vmem>>, vector<1x128xf32>
    %7 = vector.broadcast %6 : vector<1x128xf32> to vector<8x128xf32>
    %8 = arith.addf %5, %7 : vector<8x128xf32>
    %c0_6 = arith.constant 0 : index
    %c0_7 = arith.constant 0 : index
    %9 = vector.load %arg3[%c0_6, %c0_7] : memref<8x128xf32, #tpu.memory_space<vmem>>, vector<8x128xf32>
    %10 = arith.addf %9, %8 : vector<8x128xf32>
    %c0_8 = arith.constant 0 : index
    %c0_9 = arith.constant 0 : index
    %11 = vector.load %arg10[%c0_8, %c0_9] : memref<8x128xf32, #tpu.memory_space<vmem>>, vector<8x128xf32>
    tpu.vector_store %arg10[%c0_8, %c0_9], %10 {strides = array<i32>} : memref<8x128xf32, #tpu.memory_space<vmem>>, vector<8x128xf32>,
    return
  }
  func.func @transform_0(%arg0: i32, %arg1: i32) -> (i32, i32) {
    %c0_i32 = arith.constant 0 : i32
    %c0_i32_0 = arith.constant 0 : i32
    return %arg0, %c0_i32 : i32, i32
  }
  func.func @transform_1(%arg0: i32, %arg1: i32) -> (i32, i32) {
    %c0_i32 = arith.constant 0 : i32
    return %arg0, %arg1 : i32, i32
  }
  func.func @transform_2(%arg0: i32, %arg1: i32) -> (i32, i32) {
    %c0_i32 = arith.constant 0 : i32
    %c0_i32_0 = arith.constant 0 : i32
    %c0_i32_1 = arith.constant 0 : i32
    return %c0_i32, %c0_i32_0 : i32, i32
  }
  func.func @transform_3(%arg0: i32, %arg1: i32) -> (i32, i32) {
    %c0_i32 = arith.constant 0 : i32
    %c0_i32_0 = arith.constant 0 : i32
    %c0_i32_1 = arith.constant 0 : i32
    return %c0_i32, %c0_i32_0 : i32, i32
  }
  func.func @transform_4(%arg0: i32, %arg1: i32) -> (i32, i32) {
    %c0_i32 = arith.constant 0 : i32
    %c0_i32_0 = arith.constant 0 : i32
    %c0_i32_1 = arith.constant 0 : i32
    return %c0_i32, %c0_i32_0 : i32, i32
  }
  func.func @transform_5(%arg0: i32, %arg1: i32) -> (i32, i32) {
    %c0_i32 = arith.constant 0 : i32
    %c0_i32_0 = arith.constant 0 : i32
    %c0_i32_1 = arith.constant 0 : i32
    return %c0_i32, %c0_i32_0 : i32, i32
  }
  func.func @transform_6(%arg0: i32, %arg1: i32) -> (i32, i32) {
    %c0_i32 = arith.constant 0 : i32
    %c0_i32_0 = arith.constant 0 : i32
    return %c0_i32, %arg1 : i32, i32
  }
  func.func @transform_7(%arg0: i32, %arg1: i32) -> (i32, i32) {
    %c0_i32 = arith.constant 0 : i32
    %c0_i32_0 = arith.constant 0 : i32
    return %c0_i32, %arg1 : i32, i32
  }
  func.func @transform_8(%arg0: i32, %arg1: i32) -> (i32, i32) {
    %c0_i32 = arith.constant 0 : i32
    return %arg0, %arg1 : i32, i32
  }
}

module attributes {stable_mosaic.version = 11 : i64} {
  func.func @mlp_decoder_kernel(%arg0: i32, %arg1: i32, %arg2: memref<8x128xbf16, #tpu.memory_space<vmem>>, %arg3: memref<8x128xf32, #tpu.memory_space<vmem>>, %arg4: memref<128x256xbf16, #tpu.memory_space<vmem>>, %arg5: memref<1x256xf32, #tpu.memory_space<vmem>>, %arg6: memref<256x128xbf16, #tpu.memory_space<vmem>>, %arg7: memref<1x128xf32, #tpu.memory_space<vmem>>, %arg8: memref<128x128xbf16, #tpu.memory_space<vmem>>, %arg9: memref<1x128xf32, #tpu.memory_space<vmem>>, %arg10: memref<8x128xf32, #tpu.memory_space<vmem>>, %arg11: memref<8x128xbf16, #tpu.memory_space<vmem>>) attributes {dimension_semantics = [#tpu.dimension_semantics<parallel>, #tpu.dimension_semantics<arbitrary>], iteration_bounds = array<i64: 1, 1>, scalar_prefetch = 0 : i64, scratch_operands = 1 : i64, tpu.core_type = #tpu.core_type<tc>, window_params = [{transform_indices = @transform_0, window_bounds = array<i64: 8, 128>}, {transform_indices = @transform_1, window_bounds = array<i64: 8, 128>}, {pipeline_mode = #tpu.pipeline_mode<synchronous>, transform_indices = @transform_2, window_bounds = array<i64: 128, 256>}, {pipeline_mode = #tpu.pipeline_mode<synchronous>, transform_indices = @transform_3, window_bounds = array<i64: 1, 256>}, {pipeline_mode = #tpu.pipeline_mode<synchronous>, transform_indices = @transform_4, window_bounds = array<i64: 256, 128>}, {pipeline_mode = #tpu.pipeline_mode<synchronous>, transform_indices = @transform_5, window_bounds = array<i64: 1, 128>}, {transform_indices = @transform_6, window_bounds = array<i64: 128, 128>}, {transform_indices = @transform_7, window_bounds = array<i64: 1, 128>}, {transform_indices = @transform_8, window_bounds = array<i64: 8, 128>}]} {
    %c0_i32 = arith.constant 0 : i32
    %0 = arith.cmpi eq, %arg1, %c0_i32 : i32
    %1 = arith.extui %0 : i1 to i32
    %c0_i32_0 = arith.constant 0 : i32
    %2 = arith.cmpi ne, %1, %c0_i32_0 : i32
    scf.if %2 {
      %c0_10 = arith.constant 0 : index
      %c0_11 = arith.constant 0 : index
      %12 = vector.load %arg2[%c0_10, %c0_11] : memref<8x128xbf16, #tpu.memory_space<vmem>>, vector<8x128xbf16>
      %c0_12 = arith.constant 0 : index
      %c0_13 = arith.constant 0 : index
      %13 = vector.load %arg4[%c0_12, %c0_13] : memref<128x256xbf16, #tpu.memory_space<vmem>>, vector<128x256xbf16>
      %cst_14 = arith.constant dense<0.000000e+00> : vector<8x256xf32>
      %14 = tpu.matmul %12, %13, %cst_14 {dimension_numbers = #tpu.dot_dimension_numbers<[1], [0], [0], [1], [0, 0, 1, 1], [], []>} : vector<8x128xbf16>, vector<128x256xbf16>, vector<8x256xf32> -> vector<8x256xf32>
      %c0_15 = arith.constant 0 : index
      %c0_16 = arith.constant 0 : index
      %15 = vector.load %arg5[%c0_15, %c0_16] : memref<1x256xf32, #tpu.memory_space<vmem>>, vector<1x256xf32>
      %16 = vector.broadcast %15 : vector<1x256xf32> to vector<8x256xf32>
      %17 = arith.addf %14, %16 : vector<8x256xf32>
      %cst_17 = arith.constant 0.000000e+00 : f32
      %18 = vector.broadcast %cst_17 : f32 to vector<8x256xf32>
      %19 = arith.maximumf %17, %18 : vector<8x256xf32>
      %20 = arith.truncf %19 : vector<8x256xf32> to vector<8x256xbf16>
      %c0_18 = arith.constant 0 : index
      %c0_19 = arith.constant 0 : index
      %21 = vector.load %arg6[%c0_18, %c0_19] : memref<256x128xbf16, #tpu.memory_space<vmem>>, vector<256x128xbf16>
      %cst_20 = arith.constant dense<0.000000e+00> : vector<8x128xf32>
      %22 = tpu.matmul %20, %21, %cst_20 {dimension_numbers = #tpu.dot_dimension_numbers<[1], [0], [0], [1], [0, 0, 1, 1], [], []>} : vector<8x256xbf16>, vector<256x128xbf16>, vector<8x128xf32> -> vector<8x128xf32>
      %c0_21 = arith.constant 0 : index
      %c0_22 = arith.constant 0 : index
      %23 = vector.load %arg7[%c0_21, %c0_22] : memref<1x128xf32, #tpu.memory_space<vmem>>, vector<1x128xf32>
      %24 = vector.broadcast %23 : vector<1x128xf32> to vector<8x128xf32>
      %25 = arith.addf %22, %24 : vector<8x128xf32>
      %cst_23 = arith.constant 0.000000e+00 : f32
      %26 = vector.broadcast %cst_23 : f32 to vector<8x128xf32>
      %27 = arith.maximumf %25, %26 : vector<8x128xf32>
      %28 = arith.truncf %27 : vector<8x128xf32> to vector<8x128xbf16>
      %c0_24 = arith.constant 0 : index
      %c0_25 = arith.constant 0 : index
      %29 = vector.load %arg11[%c0_24, %c0_25] : memref<8x128xbf16, #tpu.memory_space<vmem>>, vector<8x128xbf16>
      tpu.vector_store %arg11[%c0_24, %c0_25], %28 {strides = array<i32>} : memref<8x128xbf16, #tpu.memory_space<vmem>>, vector<8x128xbf16>,
    } else {
    }
    %c0 = arith.constant 0 : index
    %c0_1 = arith.constant 0 : index
    %3 = vector.load %arg11[%c0, %c0_1] : memref<8x128xbf16, #tpu.memory_space<vmem>>, vector<8x128xbf16>
    %c0_2 = arith.constant 0 : index
    %c0_3 = arith.constant 0 : index
    %4 = vector.load %arg8[%c0_2, %c0_3] : memref<128x128xbf16, #tpu.memory_space<vmem>>, vector<128x128xbf16>
    %cst = arith.constant dense<0.000000e+00> : vector<8x128xf32>
    %5 = tpu.matmul %3, %4, %cst {dimension_numbers = #tpu.dot_dimension_numbers<[1], [0], [0], [1], [0, 0, 1, 1], [], []>} : vector<8x128xbf16>, vector<128x128xbf16>, vector<8x128xf32> -> vector<8x128xf32>
    %c0_4 = arith.constant 0 : index
    %c0_5 = arith.constant 0 : index
    %6 = vector.load %arg9[%c0_4, %c0_5] : memref<1x128xf32, #tpu.memory_space<vmem>>, vector<1x128xf32>
    %7 = vector.broadcast %6 : vector<1x128xf32> to vector<8x128xf32>
    %8 = arith.addf %5, %7 : vector<8x128xf32>
    %c0_6 = arith.constant 0 : index
    %c0_7 = arith.constant 0 : index
    %9 = vector.load %arg3[%c0_6, %c0_7] : memref<8x128xf32, #tpu.memory_space<vmem>>, vector<8x128xf32>
    %10 = arith.addf %9, %8 : vector<8x128xf32>
    %c0_8 = arith.constant 0 : index
    %c0_9 = arith.constant 0 : index
    %11 = vector.load %arg10[%c0_8, %c0_9] : memref<8x128xf32, #tpu.memory_space<vmem>>, vector<8x128xf32>
    tpu.vector_store %arg10[%c0_8, %c0_9], %10 {strides = array<i32>} : memref<8x128xf32, #tpu.memory_space<vmem>>, vector<8x128xf32>,
    return
  }
  func.func @transform_0(%arg0: i32, %arg1: i32) -> (i32, i32) {
    %c0_i32 = arith.constant 0 : i32
    %c0_i32_0 = arith.constant 0 : i32
    return %arg0, %c0_i32 : i32, i32
  }
  func.func @transform_1(%arg0: i32, %arg1: i32) -> (i32, i32) {
    %c0_i32 = arith.constant 0 : i32
    return %arg0, %arg1 : i32, i32
  }
  func.func @transform_2(%arg0: i32, %arg1: i32) -> (i32, i32) {
    %c0_i32 = arith.constant 0 : i32
    %c0_i32_0 = arith.constant 0 : i32
    %c0_i32_1 = arith.constant 0 : i32
    return %c0_i32, %c0_i32_0 : i32, i32
  }
  func.func @transform_3(%arg0: i32, %arg1: i32) -> (i32, i32) {
    %c0_i32 = arith.constant 0 : i32
    %c0_i32_0 = arith.constant 0 : i32
    %c0_i32_1 = arith.constant 0 : i32
    return %c0_i32, %c0_i32_0 : i32, i32
  }
  func.func @transform_4(%arg0: i32, %arg1: i32) -> (i32, i32) {
    %c0_i32 = arith.constant 0 : i32
    %c0_i32_0 = arith.constant 0 : i32
    %c0_i32_1 = arith.constant 0 : i32
    return %c0_i32, %c0_i32_0 : i32, i32
  }
  func.func @transform_5(%arg0: i32, %arg1: i32) -> (i32, i32) {
    %c0_i32 = arith.constant 0 : i32
    %c0_i32_0 = arith.constant 0 : i32
    %c0_i32_1 = arith.constant 0 : i32
    return %c0_i32, %c0_i32_0 : i32, i32
  }
  func.func @transform_6(%arg0: i32, %arg1: i32) -> (i32, i32) {
    %c0_i32 = arith.constant 0 : i32
    %c0_i32_0 = arith.constant 0 : i32
    return %c0_i32, %arg1 : i32, i32
  }
  func.func @transform_7(%arg0: i32, %arg1: i32) -> (i32, i32) {
    %c0_i32 = arith.constant 0 : i32
    %c0_i32_0 = arith.constant 0 : i32
    return %c0_i32, %arg1 : i32, i32
  }
  func.func @transform_8(%arg0: i32, %arg1: i32) -> (i32, i32) {
    %c0_i32 = arith.constant 0 : i32
    return %arg0, %arg1 : i32, i32
  }
}

</mosaic_0001>

<llo_original>
// kernel: tpu_custom_call.1
$region0: #{tpu_custom_call.1}
  #allocation0 [shape = 'u32[]', space=smem, size = 0x4, offset = 0x4, fixed_abs, tag = 'smem constant byte address 0x4 - core index']
  #allocation1 [shape = 'u32[144,128]{1,0:T(1,128)}', space=vmem, size = 0x12000, scoped, tag = 'internal scratch']
  #allocation2 [shape = 'bf16[8,128]{1,0:T(8,128)(2,1)}', space=vmem, size = 0x800, scoped, tag = 'scratch operand']
  %s0 = inlined_call_operand.hbm [shape: bf16[8,128], index: 0, kind: input, shape index: {}]
  %s1 = inlined_call_operand.hbm [shape: f32[8,64], index: 1, kind: input, shape index: {}]
  %s2 = inlined_call_operand.hbm [shape: bf16[128,256], index: 2, kind: input, shape index: {}]
  %s3 = inlined_call_operand.vmem [shape: f32[1,256], index: 3, kind: input, shape index: {}]
  %s4 = inlined_call_operand.hbm [shape: bf16[256,128], index: 4, kind: input, shape index: {}]
  %s5 = inlined_call_operand.vmem [shape: f32[1,128], index: 5, kind: input, shape index: {}]
  %s6 = inlined_call_operand.hbm [shape: bf16[128,128], index: 6, kind: input, shape index: {}]
  %s7 = inlined_call_operand.vmem [shape: f32[1,128], index: 7, kind: input, shape index: {}]
  %s8 = inlined_call_operand.hbm [shape: f32[8,64], index: 8, kind: output, shape index: {}]
  %s9 = sld [smem:[#allocation0]]
  $region66: #{tpu_custom_call.1} parent=0
    _
  %s11 = ssub.s32 1, %s9
  %s12 = scalar_select 0, %s11, %s9
  $region1: #{tpu_custom_call.1} parent=0
    #allocation3 [shape = 'u8[2048]{0}', space=vmem, size = 0x800, scoped, tag = 'input window, operand 0, single buffered']
    #allocation4 [shape = 's32[1]{0}', space=sflag, size = 0x4, scoped, tag = 'scoped memory for tpu_custom_call.1']
    #allocation5 [shape = 's32[1]{0}', space=sflag, size = 0x4, scoped, tag = 'scoped memory for tpu_custom_call.1']
    #allocation6 [shape = 'u8[4096]{0}', space=vmem, size = 0x1000, scoped, tag = 'input window, operand 1, single buffered']
    #allocation7 [shape = 's32[1]{0}', space=sflag, size = 0x4, scoped, tag = 'scoped memory for tpu_custom_call.1']
    #allocation8 [shape = 'u8[65536]{0}', space=vmem, size = 0x10000, scoped, tag = 'input window, operand 2, single buffered']
    #allocation9 [shape = 'u8[65536]{0}', space=vmem, size = 0x10000, scoped, tag = 'input window, operand 4, single buffered']
    #allocation10 [shape = 's32[1]{0}', space=sflag, size = 0x4, scoped, tag = 'scoped memory for tpu_custom_call.1']
    #allocation11 [shape = 'u8[32768]{0}', space=vmem, size = 0x8000, scoped, tag = 'input window, operand 6, single buffered']
    #allocation12 [shape = 'u8[4096]{0}', space=vmem, size = 0x1000, scoped, tag = 'output window, operand 0, single buffered']
    %13 = vsyncpa [#allocation4], 0
    %14 = vsyncpa [#allocation7], 0
    %15 = vsyncpa [#allocation10], 0
    %16 = vsyncpa [#allocation5], 0
    // Predicated region
    $region2: #{tpu_custom_call.1} parent=1 // pred_check
      _
    $region3: #{tpu_custom_call.1} parent=1 // pred_check_branch
      %18 = sbr.rel (0) target = $region5
    $region4: #{tpu_custom_call.1} parent=1 // pred_region
      %s20 = ssub.s32 64, 64
      %21 = vsyncadd [#allocation4], %s20
      %s23 = sshll.u32 [#allocation3], 4
      %s24 = int_to_ptr.vmem [resolvable:$true] %s23
      %26 = dma.hbm_to_vmem [thread:$0]  %s0, 64, %s24, [#allocation4]
    $region5: #{tpu_custom_call.1} parent=1 // pred_fallthru
      _
    // Predicated region
    $region6: #{tpu_custom_call.1} parent=1 // pred_check
      _
    $region7: #{tpu_custom_call.1} parent=1 // pred_check_branch
      %28 = sbr.rel (0) target = $region9
    $region8: #{tpu_custom_call.1} parent=1 // pred_region
      %s30 = ssub.s32 128, 128
      %31 = vsyncadd [#allocation7], %s30
      %s33 = sshll.u32 [#allocation6], 4
      %s34 = int_to_ptr.vmem [resolvable:$true] %s33
      %36 = dma.hbm_to_vmem [thread:$0]  %s1, 128, %s34, [#allocation7]
    $region9: #{tpu_custom_call.1} parent=1 // pred_fallthru
      _
    // Predicated region
    $region10: #{tpu_custom_call.1} parent=1 // pred_check
      _
    $region11: #{tpu_custom_call.1} parent=1 // pred_check_branch
      %38 = sbr.rel (0) target = $region13
    $region12: #{tpu_custom_call.1} parent=1 // pred_region
      %s40 = ssub.s32 2048, 2048
      %41 = vsyncadd [#allocation7], %s40
      %s42 = sshll.u32 [#allocation8], 4
      %s43 = int_to_ptr.vmem [resolvable:$true] %s42
      %48 = dma.hbm_to_vmem [thread:$0]  %s2, 2048, %s43, [#allocation7], 128, 128, 8
    $region13: #{tpu_custom_call.1} parent=1 // pred_fallthru
      _
    // Predicated region
    $region14: #{tpu_custom_call.1} parent=1 // pred_check
      _
    $region15: #{tpu_custom_call.1} parent=1 // pred_check_branch
      %50 = sbr.rel (0) target = $region17
    $region16: #{tpu_custom_call.1} parent=1 // pred_region
      _
    $region17: #{tpu_custom_call.1} parent=1 // pred_fallthru
      _
    // Predicated region
    $region18: #{tpu_custom_call.1} parent=1 // pred_check
      _
    $region19: #{tpu_custom_call.1} parent=1 // pred_check_branch
      %52 = sbr.rel (0) target = $region21
    $region20: #{tpu_custom_call.1} parent=1 // pred_region
      %s54 = ssub.s32 2048, 2048
      %55 = vsyncadd [#allocation10], %s54
      %s56 = sshll.u32 [#allocation9], 4
      %s57 = int_to_ptr.vmem [resolvable:$true] %s56
      %62 = dma.hbm_to_vmem [thread:$0]  %s4, 2048, %s57, [#allocation10], 64, 64, 4
    $region21: #{tpu_custom_call.1} parent=1 // pred_fallthru
      _
    // Predicated region
    $region22: #{tpu_custom_call.1} parent=1 // pred_check
      _
    $region23: #{tpu_custom_call.1} parent=1 // pred_check_branch
      %64 = sbr.rel (0) target = $region25
    $region24: #{tpu_custom_call.1} parent=1 // pred_region
      _
    $region25: #{tpu_custom_call.1} parent=1 // pred_fallthru
      _
    // Predicated region
    $region26: #{tpu_custom_call.1} parent=1 // pred_check
      _
    $region27: #{tpu_custom_call.1} parent=1 // pred_check_branch
      %66 = sbr.rel (0) target = $region29
    $region28: #{tpu_custom_call.1} parent=1 // pred_region
      %s68 = ssub.s32 1024, 1024
      %69 = vsyncadd [#allocation10], %s68
      %s70 = sshll.u32 [#allocation11], 4
      %s71 = int_to_ptr.vmem [resolvable:$true] %s70
      %76 = dma.hbm_to_vmem [thread:$0]  %s6, 1024, %s71, [#allocation10], 64, 64, 4
    $region29: #{tpu_custom_call.1} parent=1 // pred_fallthru
      _
    // Predicated region
    $region30: #{tpu_custom_call.1} parent=1 // pred_check
      _
    $region31: #{tpu_custom_call.1} parent=1 // pred_check_branch
      %78 = sbr.rel (0) target = $region33
    $region32: #{tpu_custom_call.1} parent=1 // pred_region
      _
    $region33: #{tpu_custom_call.1} parent=1 // pred_fallthru
      _
    // Predicated region
    $region34: #{tpu_custom_call.1} parent=1 // pred_check
      _
    $region35: #{tpu_custom_call.1} parent=1 // pred_check_branch
      %80 = sbr.rel (0) target = $region37
    $region36: #{tpu_custom_call.1} parent=1 // pred_region
      %81 = dma.done [#allocation4], 64
    $region37: #{tpu_custom_call.1} parent=1 // pred_fallthru
      _
    // Predicated region
    $region38: #{tpu_custom_call.1} parent=1 // pred_check
      _
    $region39: #{tpu_custom_call.1} parent=1 // pred_check_branch
      %83 = sbr.rel (0) target = $region41
    $region40: #{tpu_custom_call.1} parent=1 // pred_region
      %84 = dma.done [#allocation7], 128
    $region41: #{tpu_custom_call.1} parent=1 // pred_fallthru
      _
    // Predicated region
    $region42: #{tpu_custom_call.1} parent=1 // pred_check
      _
    $region43: #{tpu_custom_call.1} parent=1 // pred_check_branch
      %86 = sbr.rel (0) target = $region45
    $region44: #{tpu_custom_call.1} parent=1 // pred_region
      %87 = dma.done [#allocation7], 2048
    $region45: #{tpu_custom_call.1} parent=1 // pred_fallthru
      _
    // Predicated region
    $region46: #{tpu_custom_call.1} parent=1 // pred_check
      _
    $region47: #{tpu_custom_call.1} parent=1 // pred_check_branch
      %89 = sbr.rel (0) target = $region49
    $region48: #{tpu_custom_call.1} parent=1 // pred_region
      %90 = dma.done [#allocation10], 2048
    $region49: #{tpu_custom_call.1} parent=1 // pred_fallthru
      _
    // Predicated region
    $region50: #{tpu_custom_call.1} parent=1 // pred_check
      _
    $region51: #{tpu_custom_call.1} parent=1 // pred_check_branch
      %92 = sbr.rel (0) target = $region53
    $region52: #{tpu_custom_call.1} parent=1 // pred_region
      %93 = dma.done [#allocation10], 1024
    $region53: #{tpu_custom_call.1} parent=1 // pred_fallthru
      _
    %p95 = scmp.eq.s32.totalorder 0, 0
    // Predicated region
    $region54: #{tpu_custom_call.1} parent=1 // pred_check
      %p96 = pneg %p95
    $region55: #{tpu_custom_call.1} parent=1 // pred_check_branch
      %98 = sbr.rel (%p96) target = $region57
    $region56: #{tpu_custom_call.1} parent=1 // pred_region
      %v99 = vld [vmem:[#allocation3] sm:$0xf]
      %v100 = vld [vmem:[#allocation8] sm:$0xff]
      %v101 = vld [vmem:[#allocation8 + $0x8] sm:$0xff]
      %v102 = vld [vmem:[#allocation8 + $0x10] sm:$0xff]
      %v103 = vld [vmem:[#allocation8 + $0x18] sm:$0xff]
      %v104 = vld [vmem:[#allocation8 + $0x20] sm:$0xff]
      %v105 = vld [vmem:[#allocation8 + $0x28] sm:$0xff]
      %v106 = vld [vmem:[#allocation8 + $0x30] sm:$0xff]
      %v107 = vld [vmem:[#allocation8 + $0x38] sm:$0xff]
      %v108 = vld [vmem:[#allocation8 + $0x40] sm:$0xff]
      %v109 = vld [vmem:[#allocation8 + $0x48] sm:$0xff]
      %v110 = vld [vmem:[#allocation8 + $0x50] sm:$0xff]
      %v111 = vld [vmem:[#allocation8 + $0x58] sm:$0xff]
      %v112 = vld [vmem:[#allocation8 + $0x60] sm:$0xff]
      %v113 = vld [vmem:[#allocation8 + $0x68] sm:$0xff]
      %v114 = vld [vmem:[#allocation8 + $0x70] sm:$0xff]
      %v115 = vld [vmem:[#allocation8 + $0x78] sm:$0xff]
      %v116 = vld [vmem:[%s3] sm:$0x3]
      %v118 = vlaneseq
      %v119 = vshrl.u32 %v118, 7
      %v120 = vsub.s32 0, %v119
      %v121 = vrot.slane %v116, %v120
      %v122 = vlaneseq
      %v123 = vshrl.u32 %v122, 7
      %v124 = vsub.s32 1, %v123
      %v125 = vrot.slane %v116, %v124
      %v144 = vunpack.c.l.b16 %v100
      %v145 = vunpack.c.h.b16 %v100
      %v146 = vunpack.c.l.b16 %v101
      %v147 = vunpack.c.h.b16 %v101
      %v148 = vunpack.c.l.b16 %v102
      %v149 = vunpack.c.h.b16 %v102
      %v150 = vunpack.c.l.b16 %v103
      %v151 = vunpack.c.h.b16 %v103
      %v152 = vunpack.c.l.b16 %v104
      %v153 = vunpack.c.h.b16 %v104
      %v154 = vunpack.c.l.b16 %v105
      %v155 = vunpack.c.h.b16 %v105
      %v156 = vunpack.c.l.b16 %v106
      %v157 = vunpack.c.h.b16 %v106
      %v158 = vunpack.c.l.b16 %v107
      %v159 = vunpack.c.h.b16 %v107
      %v160 = vunpack.c.l.b16 %v108
      %v161 = vunpack.c.h.b16 %v108
      %v162 = vunpack.c.l.b16 %v109
      %v163 = vunpack.c.h.b16 %v109
      %v164 = vunpack.c.l.b16 %v110
      %v165 = vunpack.c.h.b16 %v110
      %v166 = vunpack.c.l.b16 %v111
      %v167 = vunpack.c.h.b16 %v111
      %v168 = vunpack.c.l.b16 %v112
      %v169 = vunpack.c.h.b16 %v112
      %v170 = vunpack.c.l.b16 %v113
      %v171 = vunpack.c.h.b16 %v113
      %v172 = vunpack.c.l.b16 %v114
      %v173 = vunpack.c.h.b16 %v114
      %v174 = vunpack.c.l.b16 %v115
      %v175 = vunpack.c.h.b16 %v115
      %v176 = vpack.c.b16 %v146, %v144
      %v177 = vpack.c.b16 %v147, %v145
      %v178 = vpack.c.b16 %v150, %v148
      %v179 = vpack.c.b16 %v151, %v149
      %v180 = vpack.c.b16 %v154, %v152
      %v181 = vpack.c.b16 %v155, %v153
      %v182 = vpack.c.b16 %v158, %v156
      %v183 = vpack.c.b16 %v159, %v157
      %v184 = vpack.c.b16 %v162, %v160
      %v185 = vpack.c.b16 %v163, %v161
      %v186 = vpack.c.b16 %v166, %v164
      %v187 = vpack.c.b16 %v167, %v165
      %v188 = vpack.c.b16 %v170, %v168
      %v189 = vpack.c.b16 %v171, %v169
      %v190 = vpack.c.b16 %v174, %v172
      %v191 = vpack.c.b16 %v175, %v173
      %208 = vmatprep.subr.bf16.mxu0 %v177
      %209 = vmatpush1.bf16.msra.mxu0 %v176
      %210 = vmatprep.subr.bf16.mxu0 %v179
      %211 = vmatpush1.bf16.msra.mxu0 %v178
      %212 = vmatprep.subr.bf16.mxu0 %v181
      %213 = vmatpush1.bf16.msra.mxu0 %v180
      %214 = vmatprep.subr.bf16.mxu0 %v183
      %215 = vmatpush1.bf16.msra.mxu0 %v182
      %216 = vmatprep.subr.bf16.mxu0 %v185
      %217 = vmatpush1.bf16.msra.mxu0 %v184
      %218 = vmatprep.subr.bf16.mxu0 %v187
      %219 = vmatpush1.bf16.msra.mxu0 %v186
      %220 = vmatprep.subr.bf16.mxu0 %v189
      %221 = vmatpush1.bf16.msra.mxu0 %v188
      %222 = vmatprep.subr.bf16.mxu0 %v191
      %223 = vmatpush1.bf16.msra.mxu0 %v190
      %224 = vmatprep.subr.bf16.mxu0 0
      %225 = vmatpush1.bf16.msra.mxu0 0
      %226 = vmatprep.subr.bf16.mxu0 0
      %227 = vmatpush1.bf16.msra.mxu0 0
      %228 = vmatprep.subr.bf16.mxu0 0
      %229 = vmatpush1.bf16.msra.mxu0 0
      %230 = vmatprep.subr.bf16.mxu0 0
      %231 = vmatpush1.bf16.msra.mxu0 0
      %232 = vmatprep.subr.bf16.mxu0 0
      %233 = vmatpush1.bf16.msra.mxu0 0
      %234 = vmatprep.subr.bf16.mxu0 0
      %235 = vmatpush1.bf16.msra.mxu0 0
      %236 = vmatprep.subr.bf16.mxu0 0
      %237 = vmatpush1.bf16.msra.mxu0 0
      %238 = vmatprep.subr.bf16.mxu0 0
      %239 = vmatpush1.bf16.msra.mxu0 0
      %240 = vmatprep.mubr.bf16.mxu0 0
      %241 = vmatmul.mubr.bf16.gmra.mrb[0].mxu0 %v99
      %v242 = vpop.f32.mrb[0].mxu0
      %v243 = vadd.f32 %v121, %v242
      %v244 = vpop.f32.mrb[0].mxu0
      %v245 = vadd.f32 %v125, %v244
      %v246 = vpop.f32.mrb[0].mxu0
      %v247 = vpop.f32.mrb[0].mxu0
      %248 = vdwg.mxu0
      %v249 = vmax.f32 %v243, 0.0
      %v250 = vmax.f32 %v245, 0.0
      %v251 = vpack.c.bf16 %v249, %v249
      %v252 = vpack.c.bf16 %v250, %v250
      %v253 = vld [vmem:[#allocation9] sm:$0xf]
      %v254 = vld [vmem:[#allocation9 + $0x4] sm:$0xf]
      %v255 = vld [vmem:[#allocation9 + $0x8] sm:$0xf]
      %v256 = vld [vmem:[#allocation9 + $0xc] sm:$0xf]
      %v257 = vld [vmem:[#allocation9 + $0x10] sm:$0xf]
      %v258 = vld [vmem:[#allocation9 + $0x14] sm:$0xf]
      %v259 = vld [vmem:[#allocation9 + $0x18] sm:$0xf]
      %v260 = vld [vmem:[#allocation9 + $0x1c] sm:$0xf]
      %v261 = vld [vmem:[#allocation9 + $0x20] sm:$0xf]
      %v262 = vld [vmem:[#allocation9 + $0x24] sm:$0xf]
      %v263 = vld [vmem:[#allocation9 + $0x28] sm:$0xf]
      %v264 = vld [vmem:[#allocation9 + $0x2c] sm:$0xf]
      %v265 = vld [vmem:[#allocation9 + $0x30] sm:$0xf]
      %v266 = vld [vmem:[#allocation9 + $0x34] sm:$0xf]
      %v267 = vld [vmem:[#allocation9 + $0x38] sm:$0xf]
      %v268 = vld [vmem:[#allocation9 + $0x3c] sm:$0xf]
      %v269 = vld [vmem:[#allocation9 + $0x40] sm:$0xf]
      %v270 = vld [vmem:[#allocation9 + $0x44] sm:$0xf]
      %v271 = vld [vmem:[#allocation9 + $0x48] sm:$0xf]
      %v272 = vld [vmem:[#allocation9 + $0x4c] sm:$0xf]
      %v273 = vld [vmem:[#allocation9 + $0x50] sm:$0xf]
      %v274 = vld [vmem:[#allocation9 + $0x54] sm:$0xf]
      %v275 = vld [vmem:[#allocation9 + $0x58] sm:$0xf]
      %v276 = vld [vmem:[#allocation9 + $0x5c] sm:$0xf]
      %v277 = vld [vmem:[#allocation9 + $0x60] sm:$0xf]
      %v278 = vld [vmem:[#allocation9 + $0x64] sm:$0xf]
      %v279 = vld [vmem:[#allocation9 + $0x68] sm:$0xf]
      %v280 = vld [vmem:[#allocation9 + $0x6c] sm:$0xf]
      %v281 = vld [vmem:[#allocation9 + $0x70] sm:$0xf]
      %v282 = vld [vmem:[#allocation9 + $0x74] sm:$0xf]
      %v283 = vld [vmem:[#allocation9 + $0x78] sm:$0xf]
      %v284 = vld [vmem:[#allocation9 + $0x7c] sm:$0xf]
      %v285 = vld [vmem:[%s5] sm:$0x1]
      %v287 = vlaneseq
      %v288 = vshrl.u32 %v287, 7
      %v289 = vsub.s32 0, %v288
      %v290 = vrot.slane %v285, %v289
      %v324 = vunpack.c.l.b16 %v253
      %v325 = vunpack.c.l.b16 %v254
      %v326 = vunpack.c.l.b16 %v255
      %v327 = vunpack.c.l.b16 %v256
      %v328 = vunpack.c.l.b16 %v257
      %v329 = vunpack.c.l.b16 %v258
      %v330 = vunpack.c.l.b16 %v259
      %v331 = vunpack.c.l.b16 %v260
      %v332 = vunpack.c.l.b16 %v261
      %v333 = vunpack.c.l.b16 %v262
      %v334 = vunpack.c.l.b16 %v263
      %v335 = vunpack.c.l.b16 %v264
      %v336 = vunpack.c.l.b16 %v265
      %v337 = vunpack.c.l.b16 %v266
      %v338 = vunpack.c.l.b16 %v267
      %v339 = vunpack.c.l.b16 %v268
      %v340 = vunpack.c.l.b16 %v269
      %v341 = vunpack.c.l.b16 %v270
      %v342 = vunpack.c.l.b16 %v271
      %v343 = vunpack.c.l.b16 %v272
      %v344 = vunpack.c.l.b16 %v273
      %v345 = vunpack.c.l.b16 %v274
      %v346 = vunpack.c.l.b16 %v275
      %v347 = vunpack.c.l.b16 %v276
      %v348 = vunpack.c.l.b16 %v277
      %v349 = vunpack.c.l.b16 %v278
      %v350 = vunpack.c.l.b16 %v279
      %v351 = vunpack.c.l.b16 %v280
      %v352 = vunpack.c.l.b16 %v281
      %v353 = vunpack.c.l.b16 %v282
      %v354 = vunpack.c.l.b16 %v283
      %v355 = vunpack.c.l.b16 %v284
      %v356 = vpack.c.b16 %v325, %v324
      %v357 = vpack.c.b16 %v327, %v326
      %v358 = vpack.c.b16 %v329, %v328
      %v359 = vpack.c.b16 %v331, %v330
      %v360 = vpack.c.b16 %v333, %v332
      %v361 = vpack.c.b16 %v335, %v334
      %v362 = vpack.c.b16 %v337, %v336
      %v363 = vpack.c.b16 %v339, %v338
      %v364 = vpack.c.b16 %v341, %v340
      %v365 = vpack.c.b16 %v343, %v342
      %v366 = vpack.c.b16 %v345, %v344
      %v367 = vpack.c.b16 %v347, %v346
      %v368 = vpack.c.b16 %v349, %v348
      %v369 = vpack.c.b16 %v351, %v350
      %v370 = vpack.c.b16 %v353, %v352
      %v371 = vpack.c.b16 %v355, %v354
      %388 = vmatprep.subr.bf16.mxu0 0
      %389 = vmatpush1.bf16.msra.mxu0 %v356
      %390 = vmatprep.subr.bf16.mxu0 0
      %391 = vmatpush1.bf16.msra.mxu0 %v357
      %392 = vmatprep.subr.bf16.mxu0 0
      %393 = vmatpush1.bf16.msra.mxu0 %v358
      %394 = vmatprep.subr.bf16.mxu0 0
      %395 = vmatpush1.bf16.msra.mxu0 %v359
      %396 = vmatprep.subr.bf16.mxu0 0
      %397 = vmatpush1.bf16.msra.mxu0 %v360
      %398 = vmatprep.subr.bf16.mxu0 0
      %399 = vmatpush1.bf16.msra.mxu0 %v361
      %400 = vmatprep.subr.bf16.mxu0 0
      %401 = vmatpush1.bf16.msra.mxu0 %v362
      %402 = vmatprep.subr.bf16.mxu0 0
      %403 = vmatpush1.bf16.msra.mxu0 %v363
      %404 = vmatprep.subr.bf16.mxu0 0
      %405 = vmatpush1.bf16.msra.mxu0 %v364
      %406 = vmatprep.subr.bf16.mxu0 0
      %407 = vmatpush1.bf16.msra.mxu0 %v365
      %408 = vmatprep.subr.bf16.mxu0 0
      %409 = vmatpush1.bf16.msra.mxu0 %v366
      %410 = vmatprep.subr.bf16.mxu0 0
      %411 = vmatpush1.bf16.msra.mxu0 %v367
      %412 = vmatprep.subr.bf16.mxu0 0
      %413 = vmatpush1.bf16.msra.mxu0 %v368
      %414 = vmatprep.subr.bf16.mxu0 0
      %415 = vmatpush1.bf16.msra.mxu0 %v369
      %416 = vmatprep.subr.bf16.mxu0 0
      %417 = vmatpush1.bf16.msra.mxu0 %v370
      %418 = vmatprep.subr.bf16.mxu0 0
      %419 = vmatpush1.bf16.msra.mxu0 %v371
      %420 = vmatprep.mubr.bf16.mxu0 %v252
      %421 = vmatmul.mubr.bf16.gmra.mrb[0].mxu0 %v251
      %v422 = vpop.f32.mrb[0].mxu0
      %v423 = vadd.f32 %v290, %v422
      %v424 = vpop.f32.mrb[0].mxu0
      %v425 = vpop.f32.mrb[0].mxu0
      %v426 = vpop.f32.mrb[0].mxu0
      %427 = vdwg.mxu0
      %v428 = vmax.f32 %v423, 0.0
      %v429 = vpack.c.bf16 %v428, %v428
      %430 = vst [vmem:[#allocation2] sm:$0xf] %v429
    $region57: #{tpu_custom_call.1} parent=1 // pred_fallthru
      _
    %v431 = vld [vmem:[#allocation2] sm:$0xf]
    %v432 = vld [vmem:[#allocation11] sm:$0xf]
    %v433 = vld [vmem:[#allocation11 + $0x4] sm:$0xf]
    %v434 = vld [vmem:[#allocation11 + $0x8] sm:$0xf]
    %v435 = vld [vmem:[#allocation11 + $0xc] sm:$0xf]
    %v436 = vld [vmem:[#allocation11 + $0x10] sm:$0xf]
    %v437 = vld [vmem:[#allocation11 + $0x14] sm:$0xf]
    %v438 = vld [vmem:[#allocation11 + $0x18] sm:$0xf]
    %v439 = vld [vmem:[#allocation11 + $0x1c] sm:$0xf]
    %v440 = vld [vmem:[#allocation11 + $0x20] sm:$0xf]
    %v441 = vld [vmem:[#allocation11 + $0x24] sm:$0xf]
    %v442 = vld [vmem:[#allocation11 + $0x28] sm:$0xf]
    %v443 = vld [vmem:[#allocation11 + $0x2c] sm:$0xf]
    %v444 = vld [vmem:[#allocation11 + $0x30] sm:$0xf]
    %v445 = vld [vmem:[#allocation11 + $0x34] sm:$0xf]
    %v446 = vld [vmem:[#allocation11 + $0x38] sm:$0xf]
    %v447 = vld [vmem:[#allocation11 + $0x3c] sm:$0xf]
    %v448 = vld [vmem:[%s7] sm:$0x1]
    %v450 = vlaneseq
    %v451 = vshrl.u32 %v450, 7
    %v452 = vsub.s32 0, %v451
    %v453 = vrot.slane %v448, %v452
    %v471 = vunpack.c.l.b16 %v432
    %v472 = vunpack.c.l.b16 %v433
    %v473 = vunpack.c.l.b16 %v434
    %v474 = vunpack.c.l.b16 %v435
    %v475 = vunpack.c.l.b16 %v436
    %v476 = vunpack.c.l.b16 %v437
    %v477 = vunpack.c.l.b16 %v438
    %v478 = vunpack.c.l.b16 %v439
    %v479 = vunpack.c.l.b16 %v440
    %v480 = vunpack.c.l.b16 %v441
    %v481 = vunpack.c.l.b16 %v442
    %v482 = vunpack.c.l.b16 %v443
    %v483 = vunpack.c.l.b16 %v444
    %v484 = vunpack.c.l.b16 %v445
    %v485 = vunpack.c.l.b16 %v446
    %v486 = vunpack.c.l.b16 %v447
    %v487 = vpack.c.b16 %v472, %v471
    %v488 = vpack.c.b16 %v474, %v473
    %v489 = vpack.c.b16 %v476, %v475
    %v490 = vpack.c.b16 %v478, %v477
    %v491 = vpack.c.b16 %v480, %v479
    %v492 = vpack.c.b16 %v482, %v481
    %v493 = vpack.c.b16 %v484, %v483
    %v494 = vpack.c.b16 %v486, %v485
    %503 = vmatprep.subr.bf16.mxu0 0
    %504 = vmatpush1.bf16.msra.mxu0 %v487
    %505 = vmatprep.subr.bf16.mxu0 0
    %506 = vmatpush1.bf16.msra.mxu0 %v488
    %507 = vmatprep.subr.bf16.mxu0 0
    %508 = vmatpush1.bf16.msra.mxu0 %v489
    %509 = vmatprep.subr.bf16.mxu0 0
    %510 = vmatpush1.bf16.msra.mxu0 %v490
    %511 = vmatprep.subr.bf16.mxu0 0
    %512 = vmatpush1.bf16.msra.mxu0 %v491
    %513 = vmatprep.subr.bf16.mxu0 0
    %514 = vmatpush1.bf16.msra.mxu0 %v492
    %515 = vmatprep.subr.bf16.mxu0 0
    %516 = vmatpush1.bf16.msra.mxu0 %v493
    %517 = vmatprep.subr.bf16.mxu0 0
    %518 = vmatpush1.bf16.msra.mxu0 %v494
    %519 = vmatprep.subr.bf16.mxu0 0
    %520 = vmatpush1.bf16.msra.mxu0 0
    %521 = vmatprep.subr.bf16.mxu0 0
    %522 = vmatpush1.bf16.msra.mxu0 0
    %523 = vmatprep.subr.bf16.mxu0 0
    %524 = vmatpush1.bf16.msra.mxu0 0
    %525 = vmatprep.subr.bf16.mxu0 0
    %526 = vmatpush1.bf16.msra.mxu0 0
    %527 = vmatprep.subr.bf16.mxu0 0
    %528 = vmatpush1.bf16.msra.mxu0 0
    %529 = vmatprep.subr.bf16.mxu0 0
    %530 = vmatpush1.bf16.msra.mxu0 0
    %531 = vmatprep.subr.bf16.mxu0 0
    %532 = vmatpush1.bf16.msra.mxu0 0
    %533 = vmatprep.subr.bf16.mxu0 0
    %534 = vmatpush1.bf16.msra.mxu0 0
    %535 = vmatprep.mubr.bf16.mxu0 0
    %536 = vmatmul.mubr.bf16.gmra.mrb[0].mxu0 %v431
    %v537 = vpop.f32.mrb[0].mxu0
    %v538 = vadd.f32 %v453, %v537
    %v539 = vpop.f32.mrb[0].mxu0
    %v540 = vpop.f32.mrb[0].mxu0
    %v541 = vpop.f32.mrb[0].mxu0
    %542 = vdwg.mxu0
    %v543 = vld [vmem:[#allocation6] sm:$0xff]
    %v544 = vadd.f32 %v543, %v538
    %545 = vst [vmem:[#allocation12] sm:$0xff] %v544
    // Predicated region
    $region58: #{tpu_custom_call.1} parent=1 // pred_check
      _
    $region59: #{tpu_custom_call.1} parent=1 // pred_check_branch
      %547 = sbr.rel (0) target = $region61
    $region60: #{tpu_custom_call.1} parent=1 // pred_region
      %s549 = ssub.s32 128, 128
      %550 = vsyncadd [#allocation5], %s549
      %s552 = sshll.u32 [#allocation12], 4
      %s553 = int_to_ptr.vmem [resolvable:$true] %s552
      %555 = dma.vmem_to_hbm [thread:$0]  %s553, 128, %s8, [#allocation5]
    $region61: #{tpu_custom_call.1} parent=1 // pred_fallthru
      _
    // Predicated region
    $region62: #{tpu_custom_call.1} parent=1 // pred_check
      _
    $region63: #{tpu_custom_call.1} parent=1 // pred_check_branch
      %557 = sbr.rel (0) target = $region65
    $region64: #{tpu_custom_call.1} parent=1 // pred_region
      %558 = dma.done [#allocation5], 128
    $region65: #{tpu_custom_call.1} parent=1 // pred_fallthru
      _
    %559 = vsyncpa [#allocation4], 1
    %560 = vsyncpa [#allocation7], 1
    %561 = vsyncpa [#allocation10], 1
    %562 = vsyncpa [#allocation5], 1

// kernel: tpu_custom_call.1
$region0: #{tpu_custom_call.1}
  #allocation0 [shape = 'u32[]', space=smem, size = 0x4, offset = 0x4, fixed_abs, tag = 'smem constant byte address 0x4 - core index']
  #allocation1 [shape = 'u32[144,128]{1,0:T(1,128)}', space=vmem, size = 0x12000, scoped, tag = 'internal scratch']
  #allocation2 [shape = 'bf16[8,128]{1,0:T(8,128)(2,1)}', space=vmem, size = 0x800, scoped, tag = 'scratch operand']
  %s0 = inlined_call_operand.hbm [shape: bf16[8,128], index: 0, kind: input, shape index: {}]
  %s1 = inlined_call_operand.hbm [shape: f32[8,64], index: 1, kind: input, shape index: {}]
  %s2 = inlined_call_operand.hbm [shape: bf16[128,256], index: 2, kind: input, shape index: {}]
  %s3 = inlined_call_operand.vmem [shape: f32[1,256], index: 3, kind: input, shape index: {}]
  %s4 = inlined_call_operand.hbm [shape: bf16[256,128], index: 4, kind: input, shape index: {}]
  %s5 = inlined_call_operand.vmem [shape: f32[1,128], index: 5, kind: input, shape index: {}]
  %s6 = inlined_call_operand.hbm [shape: bf16[128,128], index: 6, kind: input, shape index: {}]
  %s7 = inlined_call_operand.vmem [shape: f32[1,128], index: 7, kind: input, shape index: {}]
  %s8 = inlined_call_operand.hbm [shape: f32[8,64], index: 8, kind: output, shape index: {}]
  %s9 = sld [smem:[#allocation0]]
  $region66: #{tpu_custom_call.1} parent=0
    _
  %s11 = ssub.s32 1, %s9
  %s12 = scalar_select 0, %s11, %s9
  $region1: #{tpu_custom_call.1} parent=0
    #allocation3 [shape = 'u8[2048]{0}', space=vmem, size = 0x800, scoped, tag = 'input window, operand 0, single buffered']
    #allocation4 [shape = 's32[1]{0}', space=sflag, size = 0x4, scoped, tag = 'scoped memory for tpu_custom_call.1']
    #allocation5 [shape = 's32[1]{0}', space=sflag, size = 0x4, scoped, tag = 'scoped memory for tpu_custom_call.1']
    #allocation6 [shape = 'u8[4096]{0}', space=vmem, size = 0x1000, scoped, tag = 'input window, operand 1, single buffered']
    #allocation7 [shape = 's32[1]{0}', space=sflag, size = 0x4, scoped, tag = 'scoped memory for tpu_custom_call.1']
    #allocation8 [shape = 'u8[65536]{0}', space=vmem, size = 0x10000, scoped, tag = 'input window, operand 2, single buffered']
    #allocation9 [shape = 'u8[65536]{0}', space=vmem, size = 0x10000, scoped, tag = 'input window, operand 4, single buffered']
    #allocation10 [shape = 's32[1]{0}', space=sflag, size = 0x4, scoped, tag = 'scoped memory for tpu_custom_call.1']
    #allocation11 [shape = 'u8[32768]{0}', space=vmem, size = 0x8000, scoped, tag = 'input window, operand 6, single buffered']
    #allocation12 [shape = 'u8[4096]{0}', space=vmem, size = 0x1000, scoped, tag = 'output window, operand 0, single buffered']
    %13 = vsyncpa [#allocation4], 0
    %14 = vsyncpa [#allocation7], 0
    %15 = vsyncpa [#allocation10], 0
    %16 = vsyncpa [#allocation5], 0
    // Predicated region
    $region2: #{tpu_custom_call.1} parent=1 // pred_check
      _
    $region3: #{tpu_custom_call.1} parent=1 // pred_check_branch
      %18 = sbr.rel (0) target = $region5
    $region4: #{tpu_custom_call.1} parent=1 // pred_region
      %s20 = ssub.s32 64, 64
      %21 = vsyncadd [#allocation4], %s20
      %s23 = sshll.u32 [#allocation3], 4
      %s24 = int_to_ptr.vmem [resolvable:$true] %s23
      %26 = dma.hbm_to_vmem [thread:$0]  %s0, 64, %s24, [#allocation4]
    $region5: #{tpu_custom_call.1} parent=1 // pred_fallthru
      _
    // Predicated region
    $region6: #{tpu_custom_call.1} parent=1 // pred_check
      _
    $region7: #{tpu_custom_call.1} parent=1 // pred_check_branch
      %28 = sbr.rel (0) target = $region9
    $region8: #{tpu_custom_call.1} parent=1 // pred_region
      %s30 = ssub.s32 128, 128
      %31 = vsyncadd [#allocation7], %s30
      %s33 = sshll.u32 [#allocation6], 4
      %s34 = int_to_ptr.vmem [resolvable:$true] %s33
      %36 = dma.hbm_to_vmem [thread:$0]  %s1, 128, %s34, [#allocation7]
    $region9: #{tpu_custom_call.1} parent=1 // pred_fallthru
      _
    // Predicated region
    $region10: #{tpu_custom_call.1} parent=1 // pred_check
      _
    $region11: #{tpu_custom_call.1} parent=1 // pred_check_branch
      %38 = sbr.rel (0) target = $region13
    $region12: #{tpu_custom_call.1} parent=1 // pred_region
      %s40 = ssub.s32 2048, 2048
      %41 = vsyncadd [#allocation7], %s40
      %s42 = sshll.u32 [#allocation8], 4
      %s43 = int_to_ptr.vmem [resolvable:$true] %s42
      %48 = dma.hbm_to_vmem [thread:$0]  %s2, 2048, %s43, [#allocation7], 128, 128, 8
    $region13: #{tpu_custom_call.1} parent=1 // pred_fallthru
      _
    // Predicated region
    $region14: #{tpu_custom_call.1} parent=1 // pred_check
      _
    $region15: #{tpu_custom_call.1} parent=1 // pred_check_branch
      %50 = sbr.rel (0) target = $region17
    $region16: #{tpu_custom_call.1} parent=1 // pred_region
      _
    $region17: #{tpu_custom_call.1} parent=1 // pred_fallthru
      _
    // Predicated region
    $region18: #{tpu_custom_call.1} parent=1 // pred_check
      _
    $region19: #{tpu_custom_call.1} parent=1 // pred_check_branch
      %52 = sbr.rel (0) target = $region21
    $region20: #{tpu_custom_call.1} parent=1 // pred_region
      %s54 = ssub.s32 2048, 2048
      %55 = vsyncadd [#allocation10], %s54
      %s56 = sshll.u32 [#allocation9], 4
      %s57 = int_to_ptr.vmem [resolvable:$true] %s56
      %62 = dma.hbm_to_vmem [thread:$0]  %s4, 2048, %s57, [#allocation10], 64, 64, 4
    $region21: #{tpu_custom_call.1} parent=1 // pred_fallthru
      _
    // Predicated region
    $region22: #{tpu_custom_call.1} parent=1 // pred_check
      _
    $region23: #{tpu_custom_call.1} parent=1 // pred_check_branch
      %64 = sbr.rel (0) target = $region25
    $region24: #{tpu_custom_call.1} parent=1 // pred_region
      _
    $region25: #{tpu_custom_call.1} parent=1 // pred_fallthru
      _
    // Predicated region
    $region26: #{tpu_custom_call.1} parent=1 // pred_check
      _
    $region27: #{tpu_custom_call.1} parent=1 // pred_check_branch
      %66 = sbr.rel (0) target = $region29
    $region28: #{tpu_custom_call.1} parent=1 // pred_region
      %s68 = ssub.s32 1024, 1024
      %69 = vsyncadd [#allocation10], %s68
      %s70 = sshll.u32 [#allocation11], 4
      %s71 = int_to_ptr.vmem [resolvable:$true] %s70
      %76 = dma.hbm_to_vmem [thread:$0]  %s6, 1024, %s71, [#allocation10], 64, 64, 4
    $region29: #{tpu_custom_call.1} parent=1 // pred_fallthru
      _
    // Predicated region
    $region30: #{tpu_custom_call.1} parent=1 // pred_check
      _
    $region31: #{tpu_custom_call.1} parent=1 // pred_check_branch
      %78 = sbr.rel (0) target = $region33
    $region32: #{tpu_custom_call.1} parent=1 // pred_region
      _
    $region33: #{tpu_custom_call.1} parent=1 // pred_fallthru
      _
    // Predicated region
    $region34: #{tpu_custom_call.1} parent=1 // pred_check
      _
    $region35: #{tpu_custom_call.1} parent=1 // pred_check_branch
      %80 = sbr.rel (0) target = $region37
    $region36: #{tpu_custom_call.1} parent=1 // pred_region
      %81 = dma.done [#allocation4], 64
    $region37: #{tpu_custom_call.1} parent=1 // pred_fallthru
      _
    // Predicated region
    $region38: #{tpu_custom_call.1} parent=1 // pred_check
      _
    $region39: #{tpu_custom_call.1} parent=1 // pred_check_branch
      %83 = sbr.rel (0) target = $region41
    $region40: #{tpu_custom_call.1} parent=1 // pred_region
      %84 = dma.done [#allocation7], 128
    $region41: #{tpu_custom_call.1} parent=1 // pred_fallthru
      _
    // Predicated region
    $region42: #{tpu_custom_call.1} parent=1 // pred_check
      _
    $region43: #{tpu_custom_call.1} parent=1 // pred_check_branch
      %86 = sbr.rel (0) target = $region45
    $region44: #{tpu_custom_call.1} parent=1 // pred_region
      %87 = dma.done [#allocation7], 2048
    $region45: #{tpu_custom_call.1} parent=1 // pred_fallthru
      _
    // Predicated region
    $region46: #{tpu_custom_call.1} parent=1 // pred_check
      _
    $region47: #{tpu_custom_call.1} parent=1 // pred_check_branch
      %89 = sbr.rel (0) target = $region49
    $region48: #{tpu_custom_call.1} parent=1 // pred_region
      %90 = dma.done [#allocation10], 2048
    $region49: #{tpu_custom_call.1} parent=1 // pred_fallthru
      _
    // Predicated region
    $region50: #{tpu_custom_call.1} parent=1 // pred_check
      _
    $region51: #{tpu_custom_call.1} parent=1 // pred_check_branch
      %92 = sbr.rel (0) target = $region53
    $region52: #{tpu_custom_call.1} parent=1 // pred_region
      %93 = dma.done [#allocation10], 1024
    $region53: #{tpu_custom_call.1} parent=1 // pred_fallthru
      _
    %p95 = scmp.eq.s32.totalorder 0, 0
    // Predicated region
    $region54: #{tpu_custom_call.1} parent=1 // pred_check
      %p96 = pneg %p95
    $region55: #{tpu_custom_call.1} parent=1 // pred_check_branch
      %98 = sbr.rel (%p96) target = $region57
    $region56: #{tpu_custom_call.1} parent=1 // pred_region
      %v99 = vld [vmem:[#allocation3] sm:$0xf]
      %v100 = vld [vmem:[#allocation8] sm:$0xff]
      %v101 = vld [vmem:[#allocation8 + $0x8] sm:$0xff]
      %v102 = vld [vmem:[#allocation8 + $0x10] sm:$0xff]
      %v103 = vld [vmem:[#allocation8 + $0x18] sm:$0xff]
      %v104 = vld [vmem:[#allocation8 + $0x20] sm:$0xff]
      %v105 = vld [vmem:[#allocation8 + $0x28] sm:$0xff]
      %v106 = vld [vmem:[#allocation8 + $0x30] sm:$0xff]
      %v107 = vld [vmem:[#allocation8 + $0x38] sm:$0xff]
      %v108 = vld [vmem:[#allocation8 + $0x40] sm:$0xff]
      %v109 = vld [vmem:[#allocation8 + $0x48] sm:$0xff]
      %v110 = vld [vmem:[#allocation8 + $0x50] sm:$0xff]
      %v111 = vld [vmem:[#allocation8 + $0x58] sm:$0xff]
      %v112 = vld [vmem:[#allocation8 + $0x60] sm:$0xff]
      %v113 = vld [vmem:[#allocation8 + $0x68] sm:$0xff]
      %v114 = vld [vmem:[#allocation8 + $0x70] sm:$0xff]
      %v115 = vld [vmem:[#allocation8 + $0x78] sm:$0xff]
      %v116 = vld [vmem:[%s3] sm:$0x3]
      %v118 = vlaneseq
      %v119 = vshrl.u32 %v118, 7
      %v120 = vsub.s32 0, %v119
      %v121 = vrot.slane %v116, %v120
      %v122 = vlaneseq
      %v123 = vshrl.u32 %v122, 7
      %v124 = vsub.s32 1, %v123
      %v125 = vrot.slane %v116, %v124
      %v144 = vunpack.c.l.b16 %v100
      %v145 = vunpack.c.h.b16 %v100
      %v146 = vunpack.c.l.b16 %v101
      %v147 = vunpack.c.h.b16 %v101
      %v148 = vunpack.c.l.b16 %v102
      %v149 = vunpack.c.h.b16 %v102
      %v150 = vunpack.c.l.b16 %v103
      %v151 = vunpack.c.h.b16 %v103
      %v152 = vunpack.c.l.b16 %v104
      %v153 = vunpack.c.h.b16 %v104
      %v154 = vunpack.c.l.b16 %v105
      %v155 = vunpack.c.h.b16 %v105
      %v156 = vunpack.c.l.b16 %v106
      %v157 = vunpack.c.h.b16 %v106
      %v158 = vunpack.c.l.b16 %v107
      %v159 = vunpack.c.h.b16 %v107
      %v160 = vunpack.c.l.b16 %v108
      %v161 = vunpack.c.h.b16 %v108
      %v162 = vunpack.c.l.b16 %v109
      %v163 = vunpack.c.h.b16 %v109
      %v164 = vunpack.c.l.b16 %v110
      %v165 = vunpack.c.h.b16 %v110
      %v166 = vunpack.c.l.b16 %v111
      %v167 = vunpack.c.h.b16 %v111
      %v168 = vunpack.c.l.b16 %v112
      %v169 = vunpack.c.h.b16 %v112
      %v170 = vunpack.c.l.b16 %v113
      %v171 = vunpack.c.h.b16 %v113
      %v172 = vunpack.c.l.b16 %v114
      %v173 = vunpack.c.h.b16 %v114
      %v174 = vunpack.c.l.b16 %v115
      %v175 = vunpack.c.h.b16 %v115
      %v176 = vpack.c.b16 %v146, %v144
      %v177 = vpack.c.b16 %v147, %v145
      %v178 = vpack.c.b16 %v150, %v148
      %v179 = vpack.c.b16 %v151, %v149
      %v180 = vpack.c.b16 %v154, %v152
      %v181 = vpack.c.b16 %v155, %v153
      %v182 = vpack.c.b16 %v158, %v156
      %v183 = vpack.c.b16 %v159, %v157
      %v184 = vpack.c.b16 %v162, %v160
      %v185 = vpack.c.b16 %v163, %v161
      %v186 = vpack.c.b16 %v166, %v164
      %v187 = vpack.c.b16 %v167, %v165
      %v188 = vpack.c.b16 %v170, %v168
      %v189 = vpack.c.b16 %v171, %v169
      %v190 = vpack.c.b16 %v174, %v172
      %v191 = vpack.c.b16 %v175, %v173
      %208 = vmatprep.subr.bf16.mxu0 %v177
      %209 = vmatpush1.bf16.msra.mxu0 %v176
      %210 = vmatprep.subr.bf16.mxu0 %v179
      %211 = vmatpush1.bf16.msra.mxu0 %v178
      %212 = vmatprep.subr.bf16.mxu0 %v181
      %213 = vmatpush1.bf16.msra.mxu0 %v180
      %214 = vmatprep.subr.bf16.mxu0 %v183
      %215 = vmatpush1.bf16.msra.mxu0 %v182
      %216 = vmatprep.subr.bf16.mxu0 %v185
      %217 = vmatpush1.bf16.msra.mxu0 %v184
      %218 = vmatprep.subr.bf16.mxu0 %v187
      %219 = vmatpush1.bf16.msra.mxu0 %v186
      %220 = vmatprep.subr.bf16.mxu0 %v189
      %221 = vmatpush1.bf16.msra.mxu0 %v188
      %222 = vmatprep.subr.bf16.mxu0 %v191
      %223 = vmatpush1.bf16.msra.mxu0 %v190
      %224 = vmatprep.subr.bf16.mxu0 0
      %225 = vmatpush1.bf16.msra.mxu0 0
      %226 = vmatprep.subr.bf16.mxu0 0
      %227 = vmatpush1.bf16.msra.mxu0 0
      %228 = vmatprep.subr.bf16.mxu0 0
      %229 = vmatpush1.bf16.msra.mxu0 0
      %230 = vmatprep.subr.bf16.mxu0 0
      %231 = vmatpush1.bf16.msra.mxu0 0
      %232 = vmatprep.subr.bf16.mxu0 0
      %233 = vmatpush1.bf16.msra.mxu0 0
      %234 = vmatprep.subr.bf16.mxu0 0
      %235 = vmatpush1.bf16.msra.mxu0 0
      %236 = vmatprep.subr.bf16.mxu0 0
      %237 = vmatpush1.bf16.msra.mxu0 0
      %238 = vmatprep.subr.bf16.mxu0 0
      %239 = vmatpush1.bf16.msra.mxu0 0
      %240 = vmatprep.mubr.bf16.mxu0 0
      %241 = vmatmul.mubr.bf16.gmra.mrb[0].mxu0 %v99
      %v242 = vpop.f32.mrb[0].mxu0
      %v243 = vadd.f32 %v121, %v242
      %v244 = vpop.f32.mrb[0].mxu0
      %v245 = vadd.f32 %v125, %v244
      %v246 = vpop.f32.mrb[0].mxu0
      %v247 = vpop.f32.mrb[0].mxu0
      %248 = vdwg.mxu0
      %v249 = vmax.f32 %v243, 0.0
      %v250 = vmax.f32 %v245, 0.0
      %v251 = vpack.c.bf16 %v249, %v249
      %v252 = vpack.c.bf16 %v250, %v250
      %v253 = vld [vmem:[#allocation9] sm:$0xf]
      %v254 = vld [vmem:[#allocation9 + $0x4] sm:$0xf]
      %v255 = vld [vmem:[#allocation9 + $0x8] sm:$0xf]
      %v256 = vld [vmem:[#allocation9 + $0xc] sm:$0xf]
      %v257 = vld [vmem:[#allocation9 + $0x10] sm:$0xf]
      %v258 = vld [vmem:[#allocation9 + $0x14] sm:$0xf]
      %v259 = vld [vmem:[#allocation9 + $0x18] sm:$0xf]
      %v260 = vld [vmem:[#allocation9 + $0x1c] sm:$0xf]
      %v261 = vld [vmem:[#allocation9 + $0x20] sm:$0xf]
      %v262 = vld [vmem:[#allocation9 + $0x24] sm:$0xf]
      %v263 = vld [vmem:[#allocation9 + $0x28] sm:$0xf]
      %v264 = vld [vmem:[#allocation9 + $0x2c] sm:$0xf]
      %v265 = vld [vmem:[#allocation9 + $0x30] sm:$0xf]
      %v266 = vld [vmem:[#allocation9 + $0x34] sm:$0xf]
      %v267 = vld [vmem:[#allocation9 + $0x38] sm:$0xf]
      %v268 = vld [vmem:[#allocation9 + $0x3c] sm:$0xf]
      %v269 = vld [vmem:[#allocation9 + $0x40] sm:$0xf]
      %v270 = vld [vmem:[#allocation9 + $0x44] sm:$0xf]
      %v271 = vld [vmem:[#allocation9 + $0x48] sm:$0xf]
      %v272 = vld [vmem:[#allocation9 + $0x4c] sm:$0xf]
      %v273 = vld [vmem:[#allocation9 + $0x50] sm:$0xf]
      %v274 = vld [vmem:[#allocation9 + $0x54] sm:$0xf]
      %v275 = vld [vmem:[#allocation9 + $0x58] sm:$0xf]
      %v276 = vld [vmem:[#allocation9 + $0x5c] sm:$0xf]
      %v277 = vld [vmem:[#allocation9 + $0x60] sm:$0xf]
      %v278 = vld [vmem:[#allocation9 + $0x64] sm:$0xf]
      %v279 = vld [vmem:[#allocation9 + $0x68] sm:$0xf]
      %v280 = vld [vmem:[#allocation9 + $0x6c] sm:$0xf]
      %v281 = vld [vmem:[#allocation9 + $0x70] sm:$0xf]
      %v282 = vld [vmem:[#allocation9 + $0x74] sm:$0xf]
      %v283 = vld [vmem:[#allocation9 + $0x78] sm:$0xf]
      %v284 = vld [vmem:[#allocation9 + $0x7c] sm:$0xf]
      %v285 = vld [vmem:[%s5] sm:$0x1]
      %v287 = vlaneseq
      %v288 = vshrl.u32 %v287, 7
      %v289 = vsub.s32 0, %v288
      %v290 = vrot.slane %v285, %v289
      %v324 = vunpack.c.l.b16 %v253
      %v325 = vunpack.c.l.b16 %v254
      %v326 = vunpack.c.l.b16 %v255
      %v327 = vunpack.c.l.b16 %v256
      %v328 = vunpack.c.l.b16 %v257
      %v329 = vunpack.c.l.b16 %v258
      %v330 = vunpack.c.l.b16 %v259
      %v331 = vunpack.c.l.b16 %v260
      %v332 = vunpack.c.l.b16 %v261
      %v333 = vunpack.c.l.b16 %v262
      %v334 = vunpack.c.l.b16 %v263
      %v335 = vunpack.c.l.b16 %v264
      %v336 = vunpack.c.l.b16 %v265
      %v337 = vunpack.c.l.b16 %v266
      %v338 = vunpack.c.l.b16 %v267
      %v339 = vunpack.c.l.b16 %v268
      %v340 = vunpack.c.l.b16 %v269
      %v341 = vunpack.c.l.b16 %v270
      %v342 = vunpack.c.l.b16 %v271
      %v343 = vunpack.c.l.b16 %v272
      %v344 = vunpack.c.l.b16 %v273
      %v345 = vunpack.c.l.b16 %v274
      %v346 = vunpack.c.l.b16 %v275
      %v347 = vunpack.c.l.b16 %v276
      %v348 = vunpack.c.l.b16 %v277
      %v349 = vunpack.c.l.b16 %v278
      %v350 = vunpack.c.l.b16 %v279
      %v351 = vunpack.c.l.b16 %v280
      %v352 = vunpack.c.l.b16 %v281
      %v353 = vunpack.c.l.b16 %v282
      %v354 = vunpack.c.l.b16 %v283
      %v355 = vunpack.c.l.b16 %v284
      %v356 = vpack.c.b16 %v325, %v324
      %v357 = vpack.c.b16 %v327, %v326
      %v358 = vpack.c.b16 %v329, %v328
      %v359 = vpack.c.b16 %v331, %v330
      %v360 = vpack.c.b16 %v333, %v332
      %v361 = vpack.c.b16 %v335, %v334
      %v362 = vpack.c.b16 %v337, %v336
      %v363 = vpack.c.b16 %v339, %v338
      %v364 = vpack.c.b16 %v341, %v340
      %v365 = vpack.c.b16 %v343, %v342
      %v366 = vpack.c.b16 %v345, %v344
      %v367 = vpack.c.b16 %v347, %v346
      %v368 = vpack.c.b16 %v349, %v348
      %v369 = vpack.c.b16 %v351, %v350
      %v370 = vpack.c.b16 %v353, %v352
      %v371 = vpack.c.b16 %v355, %v354
      %388 = vmatprep.subr.bf16.mxu0 0
      %389 = vmatpush1.bf16.msra.mxu0 %v356
      %390 = vmatprep.subr.bf16.mxu0 0
      %391 = vmatpush1.bf16.msra.mxu0 %v357
      %392 = vmatprep.subr.bf16.mxu0 0
      %393 = vmatpush1.bf16.msra.mxu0 %v358
      %394 = vmatprep.subr.bf16.mxu0 0
      %395 = vmatpush1.bf16.msra.mxu0 %v359
      %396 = vmatprep.subr.bf16.mxu0 0
      %397 = vmatpush1.bf16.msra.mxu0 %v360
      %398 = vmatprep.subr.bf16.mxu0 0
      %399 = vmatpush1.bf16.msra.mxu0 %v361
      %400 = vmatprep.subr.bf16.mxu0 0
      %401 = vmatpush1.bf16.msra.mxu0 %v362
      %402 = vmatprep.subr.bf16.mxu0 0
      %403 = vmatpush1.bf16.msra.mxu0 %v363
      %404 = vmatprep.subr.bf16.mxu0 0
      %405 = vmatpush1.bf16.msra.mxu0 %v364
      %406 = vmatprep.subr.bf16.mxu0 0
      %407 = vmatpush1.bf16.msra.mxu0 %v365
      %408 = vmatprep.subr.bf16.mxu0 0
      %409 = vmatpush1.bf16.msra.mxu0 %v366
      %410 = vmatprep.subr.bf16.mxu0 0
      %411 = vmatpush1.bf16.msra.mxu0 %v367
      %412 = vmatprep.subr.bf16.mxu0 0
      %413 = vmatpush1.bf16.msra.mxu0 %v368
      %414 = vmatprep.subr.bf16.mxu0 0
      %415 = vmatpush1.bf16.msra.mxu0 %v369
      %416 = vmatprep.subr.bf16.mxu0 0
      %417 = vmatpush1.bf16.msra.mxu0 %v370
      %418 = vmatprep.subr.bf16.mxu0 0
      %419 = vmatpush1.bf16.msra.mxu0 %v371
      %420 = vmatprep.mubr.bf16.mxu0 %v252
      %421 = vmatmul.mubr.bf16.gmra.mrb[0].mxu0 %v251
      %v422 = vpop.f32.mrb[0].mxu0
      %v423 = vadd.f32 %v290, %v422
      %v424 = vpop.f32.mrb[0].mxu0
      %v425 = vpop.f32.mrb[0].mxu0
      %v426 = vpop.f32.mrb[0].mxu0
      %427 = vdwg.mxu0
      %v428 = vmax.f32 %v423, 0.0
      %v429 = vpack.c.bf16 %v428, %v428
      %430 = vst [vmem:[#allocation2] sm:$0xf] %v429
    $region57: #{tpu_custom_call.1} parent=1 // pred_fallthru
      _
    %v431 = vld [vmem:[#allocation2] sm:$0xf]
    %v432 = vld [vmem:[#allocation11] sm:$0xf]
    %v433 = vld [vmem:[#allocation11 + $0x4] sm:$0xf]
    %v434 = vld [vmem:[#allocation11 + $0x8] sm:$0xf]
    %v435 = vld [vmem:[#allocation11 + $0xc] sm:$0xf]
    %v436 = vld [vmem:[#allocation11 + $0x10] sm:$0xf]
    %v437 = vld [vmem:[#allocation11 + $0x14] sm:$0xf]
    %v438 = vld [vmem:[#allocation11 + $0x18] sm:$0xf]
    %v439 = vld [vmem:[#allocation11 + $0x1c] sm:$0xf]
    %v440 = vld [vmem:[#allocation11 + $0x20] sm:$0xf]
    %v441 = vld [vmem:[#allocation11 + $0x24] sm:$0xf]
    %v442 = vld [vmem:[#allocation11 + $0x28] sm:$0xf]
    %v443 = vld [vmem:[#allocation11 + $0x2c] sm:$0xf]
    %v444 = vld [vmem:[#allocation11 + $0x30] sm:$0xf]
    %v445 = vld [vmem:[#allocation11 + $0x34] sm:$0xf]
    %v446 = vld [vmem:[#allocation11 + $0x38] sm:$0xf]
    %v447 = vld [vmem:[#allocation11 + $0x3c] sm:$0xf]
    %v448 = vld [vmem:[%s7] sm:$0x1]
    %v450 = vlaneseq
    %v451 = vshrl.u32 %v450, 7
    %v452 = vsub.s32 0, %v451
    %v453 = vrot.slane %v448, %v452
    %v471 = vunpack.c.l.b16 %v432
    %v472 = vunpack.c.l.b16 %v433
    %v473 = vunpack.c.l.b16 %v434
    %v474 = vunpack.c.l.b16 %v435
    %v475 = vunpack.c.l.b16 %v436
    %v476 = vunpack.c.l.b16 %v437
    %v477 = vunpack.c.l.b16 %v438
    %v478 = vunpack.c.l.b16 %v439
    %v479 = vunpack.c.l.b16 %v440
    %v480 = vunpack.c.l.b16 %v441
    %v481 = vunpack.c.l.b16 %v442
    %v482 = vunpack.c.l.b16 %v443
    %v483 = vunpack.c.l.b16 %v444
    %v484 = vunpack.c.l.b16 %v445
    %v485 = vunpack.c.l.b16 %v446
    %v486 = vunpack.c.l.b16 %v447
    %v487 = vpack.c.b16 %v472, %v471
    %v488 = vpack.c.b16 %v474, %v473
    %v489 = vpack.c.b16 %v476, %v475
    %v490 = vpack.c.b16 %v478, %v477
    %v491 = vpack.c.b16 %v480, %v479
    %v492 = vpack.c.b16 %v482, %v481
    %v493 = vpack.c.b16 %v484, %v483
    %v494 = vpack.c.b16 %v486, %v485
    %503 = vmatprep.subr.bf16.mxu0 0
    %504 = vmatpush1.bf16.msra.mxu0 %v487
    %505 = vmatprep.subr.bf16.mxu0 0
    %506 = vmatpush1.bf16.msra.mxu0 %v488
    %507 = vmatprep.subr.bf16.mxu0 0
    %508 = vmatpush1.bf16.msra.mxu0 %v489
    %509 = vmatprep.subr.bf16.mxu0 0
    %510 = vmatpush1.bf16.msra.mxu0 %v490
    %511 = vmatprep.subr.bf16.mxu0 0
    %512 = vmatpush1.bf16.msra.mxu0 %v491
    %513 = vmatprep.subr.bf16.mxu0 0
    %514 = vmatpush1.bf16.msra.mxu0 %v492
    %515 = vmatprep.subr.bf16.mxu0 0
    %516 = vmatpush1.bf16.msra.mxu0 %v493
    %517 = vmatprep.subr.bf16.mxu0 0
    %518 = vmatpush1.bf16.msra.mxu0 %v494
    %519 = vmatprep.subr.bf16.mxu0 0
    %520 = vmatpush1.bf16.msra.mxu0 0
    %521 = vmatprep.subr.bf16.mxu0 0
    %522 = vmatpush1.bf16.msra.mxu0 0
    %523 = vmatprep.subr.bf16.mxu0 0
    %524 = vmatpush1.bf16.msra.mxu0 0
    %525 = vmatprep.subr.bf16.mxu0 0
    %526 = vmatpush1.bf16.msra.mxu0 0
    %527 = vmatprep.subr.bf16.mxu0 0
    %528 = vmatpush1.bf16.msra.mxu0 0
    %529 = vmatprep.subr.bf16.mxu0 0
    %530 = vmatpush1.bf16.msra.mxu0 0
    %531 = vmatprep.subr.bf16.mxu0 0
    %532 = vmatpush1.bf16.msra.mxu0 0
    %533 = vmatprep.subr.bf16.mxu0 0
    %534 = vmatpush1.bf16.msra.mxu0 0
    %535 = vmatprep.mubr.bf16.mxu0 0
    %536 = vmatmul.mubr.bf16.gmra.mrb[0].mxu0 %v431
    %v537 = vpop.f32.mrb[0].mxu0
    %v538 = vadd.f32 %v453, %v537
    %v539 = vpop.f32.mrb[0].mxu0
    %v540 = vpop.f32.mrb[0].mxu0
    %v541 = vpop.f32.mrb[0].mxu0
    %542 = vdwg.mxu0
    %v543 = vld [vmem:[#allocation6] sm:$0xff]
    %v544 = vadd.f32 %v543, %v538
    %545 = vst [vmem:[#allocation12] sm:$0xff] %v544
    // Predicated region
    $region58: #{tpu_custom_call.1} parent=1 // pred_check
      _
    $region59: #{tpu_custom_call.1} parent=1 // pred_check_branch
      %547 = sbr.rel (0) target = $region61
    $region60: #{tpu_custom_call.1} parent=1 // pred_region
      %s549 = ssub.s32 128, 128
      %550 = vsyncadd [#allocation5], %s549
      %s552 = sshll.u32 [#allocation12], 4
      %s553 = int_to_ptr.vmem [resolvable:$true] %s552
      %555 = dma.vmem_to_hbm [thread:$0]  %s553, 128, %s8, [#allocation5]
    $region61: #{tpu_custom_call.1} parent=1 // pred_fallthru
      _
    // Predicated region
    $region62: #{tpu_custom_call.1} parent=1 // pred_check
      _
    $region63: #{tpu_custom_call.1} parent=1 // pred_check_branch
      %557 = sbr.rel (0) target = $region65
    $region64: #{tpu_custom_call.1} parent=1 // pred_region
      %558 = dma.done [#allocation5], 128
    $region65: #{tpu_custom_call.1} parent=1 // pred_fallthru
      _
    %559 = vsyncpa [#allocation4], 1
    %560 = vsyncpa [#allocation7], 1
    %561 = vsyncpa [#allocation10], 1
    %562 = vsyncpa [#allocation5], 1

</llo_original>
